<compile_context>
chip_gen: v5e
topology: v5e:2x2
jax: 0.10.0
libtpu: 0.0.40
codegen_flags: <defaults>
</compile_context>

<pallas_src>
import functools

import jax
import jax.numpy as jnp
from jax.experimental import pallas as pl
from jax.experimental.pallas import tpu as pltpu


def _round_up(n, m):
    return -(-n // m) * m


def _vmem_bytes(b, t, cin, cout, out_itemsize):
    """Conservative per-step VMEM footprint (lane/sublane padded)."""
    lane = lambda n: _round_up(n, 128)
    sub = lambda n: _round_up(n, 8)
    x_blk = b * sub(t) * lane(cin) * 2                  # bf16 input block
    o_blk = b * sub(t) * lane(t) * out_itemsize         # output block
    w_blk = 2 * sub(cin) * lane(cout) * 2               # two bf16 weight mats
    g_tmp = 2 * b * sub(t) * lane(cout) * (4 + 2)       # g1/g2 (f32 acc + bf16)
    se_tmp = 2 * b * sub(t) * lane(t) * 4               # s and e, f32
    r_tmp = b * sub(t) * lane(t) * out_itemsize         # result before store
    # Pipelined blocks are double-buffered; temporaries are not.
    return 2 * (x_blk + o_blk + w_blk) + g_tmp + se_tmp + r_tmp


def _pick_b(nv, t, cin, cout, out_itemsize, budget=14 * 2**20):
    """Slices per grid step.

    Hard constraints: B divides NV (no padded rows, no output slice copy) and
    the estimated VMEM footprint fits the budget.  Soft preferences: >= 4 grid
    steps (>= 2 per TensorCore on 2-core parts), then the largest block.
    """
    divisors = [d for d in range(1, nv + 1) if nv % d == 0]
    fitting = [d for d in divisors
               if _vmem_bytes(d, t, cin, cout, out_itemsize) <= budget]
    if not fitting:
        fitting = [1]   # worst case (e.g. huge prime NV): tiny blocks, still correct
    return max(fitting, key=lambda d: (1 if nv // d >= 4 else 0, d))


def _g_spa_kernel(x_ref, w1_ref, w2_ref, o_ref, *, b, t, cin, cout):
    # x_ref  : (B, T, Cin)  bf16 — B fused (n, v) slices
    # w*_ref : (Cin, Cout)  bf16 — 1x1-conv weights, already transposed
    # o_ref  : (B, T, T)    softmax'd attention maps (out dtype)
    x = x_ref[...].reshape(b * t, cin)          # merge leading dims (free, T%8==0)

    # Two 1x1 convs as two large-M MXU matmuls that reuse the resident x vregs
    # (no lane-concat / no non-128-aligned lane slice), f32 accumulation.
    g1 = jnp.dot(x, w1_ref[...], preferred_element_type=jnp.float32)
    g2 = jnp.dot(x, w2_ref[...], preferred_element_type=jnp.float32)
    g1 = g1.reshape(b, t, cout).astype(jnp.bfloat16)     # (B, T, Cout)
    g2 = g2.reshape(b, t, cout).astype(jnp.bfloat16)     # (B, T, Cout)

    # Batched score contraction (no explicit transpose materialized).
    s = jnp.einsum("btc,bsc->bts", g1, g2,
                   preferred_element_type=jnp.float32)   # (B, T, T) f32

    # Numerically stable softmax over the last axis.  exp runs in bf16 (safe:
    # inputs are <= 0 after max subtraction); sum / reciprocal / scale in f32.
    m = jnp.max(s, axis=-1, keepdims=True)
    e = jnp.exp((s - m).astype(jnp.bfloat16)).astype(jnp.float32)
    inv = pl.reciprocal(jnp.sum(e, axis=-1, keepdims=True), approx=False)
    o_ref[...] = (e * inv).astype(o_ref.dtype)


@functools.partial(jax.jit, static_argnames=("out_dtype",))
def compute_g_spa(x_nchw, w1, w2, *, out_dtype=jnp.bfloat16):
    """x_nchw: (N, Cin, T, V); w1, w2: (Cout, Cin) conv-1x1 weights (no bias).

    Returns g: (N, V, T, T), softmax over the last axis, in `out_dtype`
    (default bf16; pass jnp.float32 to match PyTorch's output dtype exactly).
    """
    N, Cin, T, V = x_nchw.shape
    Cout = w1.shape[0]
    NV = N * V

    out_itemsize = jnp.dtype(out_dtype).itemsize
    B = _pick_b(NV, T, Cin, Cout, out_itemsize)
    grid = NV // B

    # NCHW -> (NV, T, Cin); cast to bf16 first so the permute moves half the
    # bytes (expected to fuse into a single HBM pass over x under XLA).
    x3 = jnp.transpose(x_nchw.astype(jnp.bfloat16), (0, 3, 2, 1)).reshape(NV, T, Cin)
    w1t = w1.T.astype(jnp.bfloat16)     # (Cin, Cout)
    w2t = w2.T.astype(jnp.bfloat16)     # (Cin, Cout)

    est = _vmem_bytes(B, T, Cin, Cout, out_itemsize)
    vmem_limit = int(min(32 * 2**20, max(16 * 2**20, 2 * est)))

    cost = pl.CostEstimate(
        flops=4 * NV * T * Cin * Cout + 2 * NV * T * T * Cout,
        transcendentals=NV * T * T,
        bytes_accessed=NV * T * Cin * 2 + 2 * Cin * Cout * 2
                       + NV * T * T * out_itemsize,
    )

    out = pl.pallas_call(
        functools.partial(_g_spa_kernel, b=B, t=T, cin=Cin, cout=Cout),
        out_shape=jax.ShapeDtypeStruct((NV, T, T), out_dtype),
        grid_spec=pltpu.PrefetchScalarGridSpec(
            num_scalar_prefetch=0,
            grid=(grid,),
            in_specs=[
                # 3-D blocks with full trailing (T, Cin)/(Cin, Cout) dims keep
                # the (8,128) rule satisfied for any T / Cin / Cout.
                pl.BlockSpec((B, T, Cin), lambda i: (i, 0, 0)),
                pl.BlockSpec((Cin, Cout), lambda i: (0, 0)),
                pl.BlockSpec((Cin, Cout), lambda i: (0, 0)),
            ],
            out_specs=pl.BlockSpec((B, T, T), lambda i: (i, 0, 0)),
        ),
        compiler_params=pltpu.CompilerParams(
            dimension_semantics=("parallel",),
            vmem_limit_bytes=vmem_limit,
        ),
        cost_estimate=cost,
    )(x3, w1t, w2t)

    # (NV, T, T) is contiguous with (N, V, T, T): this reshape is free.
    return out.reshape(N, V, T, T)


def _reference(x_nchw, w1, w2):
    # pure-JAX f32 reference replicating the PyTorch forward exactly
    g1 = jnp.einsum("oc,nctv->notv", w1, x_nchw)            # conv1x1 a
    g2 = jnp.einsum("oc,nctv->notv", w2, x_nchw)            # conv1x1 b
    g1p = jnp.transpose(g1, (0, 3, 2, 1))                   # (N, V, T, Cout)
    g2p = jnp.transpose(g2, (0, 3, 1, 2))                   # (N, V, Cout, T)
    g3 = jnp.einsum("nvtc,nvcs->nvts", g1p, g2p)            # (N, V, T, T)
    return jax.nn.softmax(g3, axis=-1)


if __name__ == "__main__":
    # small shapes consistent with the module: N batch, Cin=dim1, T frames, V joints
    N, Cin, Cout, T, V = 2, 32, 32, 16, 8

    key = jax.random.PRNGKey(0)
    kx, k1, k2 = jax.random.split(key, 3)
    x = jax.random.normal(kx, (N, Cin, T, V), dtype=jnp.float32)
    # Conv2d(kernel_size=1, bias=False) weight shape is (Cout, Cin, 1, 1);
    # deterministic synthetic init (kaiming-uniform-like bound).
    bound = 1.0 / (Cin ** 0.5)
    w1 = jax.random.uniform(k1, (Cout, Cin), jnp.float32, -bound, bound)
    w2 = jax.random.uniform(k2, (Cout, Cin), jnp.float32, -bound, bound)

    g = compute_g_spa(x, w1, w2)
    jax.block_until_ready(g)

    g32 = g.astype(jnp.float32)
    g_ref = _reference(x, w1, w2)
    assert g.shape == (N, V, T, T)
    # bf16 MXU operands / bf16 exp / bf16 output -> relaxed tolerance vs f32 ref
    assert jnp.allclose(g32, g_ref, atol=5e-2, rtol=5e-2)
    # softmax rows must still sum to ~1 (exact reciprocal, bf16 quantization only)
    assert jnp.allclose(jnp.sum(g32, axis=-1), 1.0, atol=2e-2)

    print("KERNEL_OK")
</pallas_src>

<mosaic_0001>
module attributes {stable_mosaic.version = 11 : i64} {
  func.func @_g_spa_kernel(%arg0: i32, %arg1: memref<4x16x32xbf16, #tpu.memory_space<vmem>>, %arg2: memref<32x32xbf16, #tpu.memory_space<vmem>>, %arg3: memref<32x32xbf16, #tpu.memory_space<vmem>>, %arg4: memref<4x16x16xbf16, #tpu.memory_space<vmem>>) attributes {dimension_semantics = [#tpu.dimension_semantics<parallel>], iteration_bounds = array<i64: 4>, scalar_prefetch = 0 : i64, scratch_operands = 0 : i64, tpu.core_type = #tpu.core_type<tc>, window_params = [{transform_indices = @transform_0, window_bounds = array<i64: 4, 16, 32>}, {pipeline_mode = #tpu.pipeline_mode<synchronous>, transform_indices = @transform_1, window_bounds = array<i64: 32, 32>}, {pipeline_mode = #tpu.pipeline_mode<synchronous>, transform_indices = @transform_2, window_bounds = array<i64: 32, 32>}, {transform_indices = @transform_3, window_bounds = array<i64: 4, 16, 16>}]} {
    %c0 = arith.constant 0 : index
    %c0_0 = arith.constant 0 : index
    %c0_1 = arith.constant 0 : index
    %0 = vector.load %arg1[%c0, %c0_0, %c0_1] : memref<4x16x32xbf16, #tpu.memory_space<vmem>>, vector<4x16x32xbf16>
    %1 = vector.shape_cast %0 : vector<4x16x32xbf16> to vector<64x32xbf16>
    %c0_2 = arith.constant 0 : index
    %c0_3 = arith.constant 0 : index
    %2 = vector.load %arg2[%c0_2, %c0_3] : memref<32x32xbf16, #tpu.memory_space<vmem>>, vector<32x32xbf16>
    %cst = arith.constant dense<0.000000e+00> : vector<64x32xf32>
    %3 = tpu.matmul %1, %2, %cst {dimension_numbers = #tpu.dot_dimension_numbers<[1], [0], [0], [1], [0, 0, 1, 1], [], []>} : vector<64x32xbf16>, vector<32x32xbf16>, vector<64x32xf32> -> vector<64x32xf32>
    %c0_4 = arith.constant 0 : index
    %c0_5 = arith.constant 0 : index
    %4 = vector.load %arg3[%c0_4, %c0_5] : memref<32x32xbf16, #tpu.memory_space<vmem>>, vector<32x32xbf16>
    %cst_6 = arith.constant dense<0.000000e+00> : vector<64x32xf32>
    %5 = tpu.matmul %1, %4, %cst_6 {dimension_numbers = #tpu.dot_dimension_numbers<[1], [0], [0], [1], [0, 0, 1, 1], [], []>} : vector<64x32xbf16>, vector<32x32xbf16>, vector<64x32xf32> -> vector<64x32xf32>
    %6 = vector.shape_cast %3 : vector<64x32xf32> to vector<4x16x32xf32>
    %7 = arith.truncf %6 : vector<4x16x32xf32> to vector<4x16x32xbf16>
    %8 = vector.shape_cast %5 : vector<64x32xf32> to vector<4x16x32xf32>
    %9 = arith.truncf %8 : vector<4x16x32xf32> to vector<4x16x32xbf16>
    "tpu.trace_start"() <{level = 10 : i32, message = "btc,bsc->bts"}> : () -> ()
    %cst_7 = arith.constant dense<0.000000e+00> : vector<4x16x16xf32>
    %10 = tpu.matmul %7, %9, %cst_7 {dimension_numbers = #tpu.dot_dimension_numbers<[2], [2], [1], [1], [0, 0, 0, 1, 1, 1], [0], [0]>} : vector<4x16x32xbf16>, vector<4x16x32xbf16>, vector<4x16x16xf32> -> vector<4x16x16xf32>
    "tpu.trace_stop"() : () -> ()
    %cst_8 = arith.constant dense<0xFF800000> : vector<4x16xf32>
    %11 = vector.multi_reduction <maximumf>, %10, %cst_8 [2] : vector<4x16x16xf32> to vector<4x16xf32>
    %12 = vector.shape_cast %11 : vector<4x16xf32> to vector<4x16x1xf32>
    %13 = vector.broadcast %12 : vector<4x16x1xf32> to vector<4x16x16xf32>
    %14 = arith.subf %10, %13 : vector<4x16x16xf32>
    %15 = arith.truncf %14 : vector<4x16x16xf32> to vector<4x16x16xbf16>
    %16 = math.exp %15 : vector<4x16x16xbf16>
    %17 = arith.extf %16 : vector<4x16x16xbf16> to vector<4x16x16xf32>
    %cst_9 = arith.constant dense<0.000000e+00> : vector<4x16xf32>
    %18 = vector.multi_reduction <add>, %17, %cst_9 [2] : vector<4x16x16xf32> to vector<4x16xf32>
    %19 = vector.shape_cast %18 : vector<4x16xf32> to vector<4x16x1xf32>
    %20 = tpu.reciprocal %19 : vector<4x16x1xf32> -> vector<4x16x1xf32>
    %21 = vector.broadcast %20 : vector<4x16x1xf32> to vector<4x16x16xf32>
    %22 = arith.mulf %17, %21 : vector<4x16x16xf32>
    %23 = arith.truncf %22 : vector<4x16x16xf32> to vector<4x16x16xbf16>
    %c0_10 = arith.constant 0 : index
    %c0_11 = arith.constant 0 : index
    %c0_12 = arith.constant 0 : index
    %24 = vector.load %arg4[%c0_10, %c0_11, %c0_12] : memref<4x16x16xbf16, #tpu.memory_space<vmem>>, vector<4x16x16xbf16>
    tpu.vector_store %arg4[%c0_10, %c0_11, %c0_12], %23 {strides = array<i32>} : memref<4x16x16xbf16, #tpu.memory_space<vmem>>, vector<4x16x16xbf16>,
    return
  }
  func.func @transform_0(%arg0: i32) -> (i32, i32, i32) {
    %c0_i32 = arith.constant 0 : i32
    %c0_i32_0 = arith.constant 0 : i32
    %c0_i32_1 = arith.constant 0 : i32
    return %arg0, %c0_i32, %c0_i32_0 : i32, i32, i32
  }
  func.func @transform_1(%arg0: i32) -> (i32, i32) {
    %c0_i32 = arith.constant 0 : i32
    %c0_i32_0 = arith.constant 0 : i32
    %c0_i32_1 = arith.constant 0 : i32
    return %c0_i32, %c0_i32_0 : i32, i32
  }
  func.func @transform_2(%arg0: i32) -> (i32, i32) {
    %c0_i32 = arith.constant 0 : i32
    %c0_i32_0 = arith.constant 0 : i32
    %c0_i32_1 = arith.constant 0 : i32
    return %c0_i32, %c0_i32_0 : i32, i32
  }
  func.func @transform_3(%arg0: i32) -> (i32, i32, i32) {
    %c0_i32 = arith.constant 0 : i32
    %c0_i32_0 = arith.constant 0 : i32
    %c0_i32_1 = arith.constant 0 : i32
    return %arg0, %c0_i32, %c0_i32_0 : i32, i32, i32
  }
}

</mosaic_0001>

<llo_original>
// kernel: compute_g_spa.1
$region0: #{compute_g_spa.1}
  #allocation0 [shape = 'u32[]', space=smem, size = 0x4, offset = 0x4, fixed_abs, tag = 'smem constant byte address 0x4 - core index']
  #allocation1 [shape = 'u32[72,128]{1,0:T(1,128)}', space=vmem, size = 0x9000, scoped, tag = 'internal scratch']
  %s0 = inlined_call_operand.vmem [shape: bf16[16,16,32], index: 0, kind: input, shape index: {}]
  %s1 = inlined_call_operand.vmem [shape: bf16[32,32], index: 1, kind: input, shape index: {}]
  %s2 = inlined_call_operand.vmem [shape: bf16[32,32], index: 2, kind: input, shape index: {}]
  %s3 = inlined_call_operand.hbm [shape: bf16[16,16,16], index: 3, kind: output, shape index: {}]
  %s4 = sld [smem:[#allocation0]]
  $region45: #{compute_g_spa.1} parent=0
    _
  %s6 = ssub.s32 1, %s4
  %s7 = scalar_select 0, %s6, %s4
  $region1: #{compute_g_spa.1} parent=0
    #allocation2 [shape = 'u8[32768]{0}', space=vmem, size = 0x8000, scoped, tag = 'output window, operand 0']
    #allocation3 [shape = 's32[2]{0}', space=sflag, size = 0x8, scoped, tag = 'scoped memory for compute_g_spa.1']
    %8 = vsyncpa [#allocation3], 0
    %s9 = scalar_lea.sflag [#allocation3], 1
    %10 = vsyncpa %s9, 0
    loop: start=0, step=1, limit=6
    $region2: #{compute_g_spa.1} parent=1 // loop_pre_header
      _
    $region3: #{compute_g_spa.1} parent=1 // loop_header
      %s12 = sphi 0, %s16
      %p13 = scmp.ge.s32.totalorder %s12, 6
      %s22 = sphi 0, %s24
      %s25 = sphi 0, %s22
      %s26 = sphi 0, %s25
      %s42 = sphi 0, %s26
      %s46 = sphi 0, %s46
      %s48 = sphi 0, %s46
      %s49 = sphi 0, %s48
      %s63 = sphi 0, %s49
      %s67 = sphi 0, %s67
      %s69 = sphi 0, %s67
      %s70 = sphi 0, %s69
      %s84 = sphi 0, %s70
      %s90 = sphi 0, %s92
      %s93 = sphi 0, %s90
      %s94 = sphi 0, %s93
      %s110 = sphi 0, %s94
    $region4: #{compute_g_spa.1} parent=1 // loop_header_branch
      %15 = sbr.rel (%p13) target = $region8
    $region5: #{compute_g_spa.1} parent=1 // loop_body
      %s17 = ssub.s32 %s12, 1
      %s18 = ssub.s32 %s12, 2
      %s19 = sadd.s32 %s12, 1
      %s20 = ssub.s32 %s12, %s19
      %p21 = scmp.eq.s32.totalorder %s20, 0
      %s23 = sadd.s32 %s22, 1
      %s24 = scalar_select %p21, %s22, %s23
      %p27 = pneg %p21
      %p28 = scmp.eq.s32.totalorder %s12, 3
      %p29 = por %p27, %p28
      %p30 = scmp.ne.s32.totalorder %s22, %s25
      %p31 = scmp.eq.s32.totalorder %s12, 0
      %p32 = por %p30, %p31
      %p33 = scmp.ne.s32.totalorder %s22, %s25
      %p34 = scmp.eq.s32.totalorder %s17, 3
      %p35 = por %p33, %p34
      %p36 = scmp.ne.s32.totalorder %s25, %s26
      %p37 = scmp.eq.s32.totalorder %s17, 0
      %p38 = por %p36, %p37
      %p39 = scmp.ne.s32.totalorder %s25, %s26
      %p40 = scmp.eq.s32.totalorder %s18, 3
      %p41 = por %p39, %p40
      %p43 = scmp.ne.s32.totalorder %s26, %s42
      %p44 = scmp.eq.s32.totalorder %s18, 0
      %p45 = por %p43, %p44
      %s47 = sadd.s32 %s46, 1
      %p50 = scmp.eq.s32.totalorder %s12, 3
      %p51 = scmp.ne.s32.totalorder %s46, %s48
      %p52 = scmp.eq.s32.totalorder %s12, 0
      %p53 = por %p51, %p52
      %p54 = scmp.ne.s32.totalorder %s46, %s48
      %p55 = scmp.eq.s32.totalorder %s17, 3
      %p56 = por %p54, %p55
      %p57 = scmp.ne.s32.totalorder %s48, %s49
      %p58 = scmp.eq.s32.totalorder %s17, 0
      %p59 = por %p57, %p58
      %p60 = scmp.ne.s32.totalorder %s48, %s49
      %p61 = scmp.eq.s32.totalorder %s18, 3
      %p62 = por %p60, %p61
      %p64 = scmp.ne.s32.totalorder %s49, %s63
      %p65 = scmp.eq.s32.totalorder %s18, 0
      %p66 = por %p64, %p65
      %s68 = sadd.s32 %s67, 1
      %p71 = scmp.eq.s32.totalorder %s12, 3
      %p72 = scmp.ne.s32.totalorder %s67, %s69
      %p73 = scmp.eq.s32.totalorder %s12, 0
      %p74 = por %p72, %p73
      %p75 = scmp.ne.s32.totalorder %s67, %s69
      %p76 = scmp.eq.s32.totalorder %s17, 3
      %p77 = por %p75, %p76
      %p78 = scmp.ne.s32.totalorder %s69, %s70
      %p79 = scmp.eq.s32.totalorder %s17, 0
      %p80 = por %p78, %p79
      %p81 = scmp.ne.s32.totalorder %s69, %s70
      %p82 = scmp.eq.s32.totalorder %s18, 3
      %p83 = por %p81, %p82
      %p85 = scmp.ne.s32.totalorder %s70, %s84
      %p86 = scmp.eq.s32.totalorder %s18, 0
      %p87 = por %p85, %p86
      %s88 = ssub.s32 %s12, %s19
      %p89 = scmp.eq.s32.totalorder %s88, 0
      %s91 = sadd.s32 %s90, 1
      %s92 = scalar_select %p89, %s90, %s91
      %p95 = pneg %p89
      %p96 = scmp.eq.s32.totalorder %s12, 3
      %p97 = por %p95, %p96
      %p98 = scmp.ne.s32.totalorder %s90, %s93
      %p99 = scmp.eq.s32.totalorder %s12, 0
      %p100 = por %p98, %p99
      %p101 = scmp.ne.s32.totalorder %s90, %s93
      %p102 = scmp.eq.s32.totalorder %s17, 3
      %p103 = por %p101, %p102
      %p104 = scmp.ne.s32.totalorder %s93, %s94
      %p105 = scmp.eq.s32.totalorder %s17, 0
      %p106 = por %p104, %p105
      %p107 = scmp.ne.s32.totalorder %s93, %s94
      %p108 = scmp.eq.s32.totalorder %s18, 3
      %p109 = por %p107, %p108
      %p111 = scmp.ne.s32.totalorder %s94, %s110
      %p112 = scmp.eq.s32.totalorder %s18, 0
      %p113 = por %p111, %p112
      %p114 = scmp.le.s32.totalorder 1, %s12
      %p115 = scmp.lt.s32.totalorder %s12, 5
      %p116 = pnand %p114, %p115
      %p117 = pneg %p116
      // Predicated region
      $region9: #{compute_g_spa.1} parent=5 // pred_check
        _
      $region10: #{compute_g_spa.1} parent=5 // pred_check_branch
        %119 = sbr.rel (%p116) target = $region12
      $region11: #{compute_g_spa.1} parent=5 // pred_region
        %s120 = ssub.s32 %s12, 1
        // Predicated region
        $region13: #{compute_g_spa.1} parent=11 // pred_check
          %p121 = pneg %p59
        $region14: #{compute_g_spa.1} parent=11 // pred_check_branch
          %123 = sbr.rel (%p121) target = $region16
        $region15: #{compute_g_spa.1} parent=11 // pred_region
          _
        $region16: #{compute_g_spa.1} parent=11 // pred_fallthru
          _
        // Predicated region
        $region17: #{compute_g_spa.1} parent=11 // pred_check
          %p124 = pneg %p80
        $region18: #{compute_g_spa.1} parent=11 // pred_check_branch
          %126 = sbr.rel (%p124) target = $region20
        $region19: #{compute_g_spa.1} parent=11 // pred_region
          _
        $region20: #{compute_g_spa.1} parent=11 // pred_fallthru
          _
      $region12: #{compute_g_spa.1} parent=5 // pred_fallthru
        _
      %p127 = scmp.lt.s32.totalorder %s12, 4
      // Predicated region
      $region21: #{compute_g_spa.1} parent=5 // pred_check
        %p128 = pneg %p127
      $region22: #{compute_g_spa.1} parent=5 // pred_check_branch
        %130 = sbr.rel (%p128) target = $region24
      $region23: #{compute_g_spa.1} parent=5 // pred_region
        // Predicated region
        $region25: #{compute_g_spa.1} parent=23 // pred_check
          %p131 = pneg %p32
        $region26: #{compute_g_spa.1} parent=23 // pred_check_branch
          %133 = sbr.rel (%p131) target = $region28
        $region27: #{compute_g_spa.1} parent=23 // pred_region
          %s134 = smul.u32 4, %s12
          %p135 = scmp.lt.s32.totalorder %s134, 15
          %s136 = scalar_select %p135, %s134, 15
          %s137 = smul.addr %s136, 2
          %s138 = smul.addr %s137, 4
          %s139 = scalar_lea.vmem %s0, %s138
          %s140 = smul.u32 4, %s12
        $region28: #{compute_g_spa.1} parent=23 // pred_fallthru
          _
      $region24: #{compute_g_spa.1} parent=5 // pred_fallthru
        _
      %p141 = scmp.le.s32.totalorder 1, %s12
      %p142 = scmp.lt.s32.totalorder %s12, 5
      %p143 = pnand %p141, %p142
      %p144 = pneg %p143
      // Predicated region
      $region29: #{compute_g_spa.1} parent=5 // pred_check
        _
      $region30: #{compute_g_spa.1} parent=5 // pred_check_branch
        %146 = sbr.rel (%p143) target = $region32
      $region31: #{compute_g_spa.1} parent=5 // pred_region
        %s147 = ssub.s32 %s12, 1
        %s148 = smul.u32 4, %s17
        %p149 = scmp.lt.s32.totalorder %s148, 15
        %s150 = scalar_select %p149, %s148, 15
        %s151 = smul.addr %s150, 2
        %s152 = smul.addr %s151, 4
        %s153 = scalar_lea.vmem %s0, %s152
        %p154 = pneg %p38
        %p155 = pneg %p35
        %p156 = pneg %p59
        %p157 = pneg %p56
        %p158 = pneg %p80
        %p159 = pneg %p77
        %p160 = pneg %p106
        %p161 = pneg %p103
        %s162 = sand.u32 %s93, 1
        %s163 = scalar_lea.sflag [#allocation3], %s162
        %s164 = sand.u32 %s93, 1
        %s165 = smul.addr %s164, 32
        %s166 = scalar_lea.vmem [#allocation2], %s165
        %s167 = smul.u32 4, %s17
        %p168 = scmp.lt.s32.totalorder %s167, 15
        %s169 = scalar_select %p168, %s167, 15
        %s170 = smul.addr %s169, 2
        %s171 = smul.addr %s170, 4
        %s172 = scalar_lea.vmem %s0, %s171
        %s173 = smul.u32 4, %s17
        %s174 = smul.u32 4, %s17
        %v176 = vld [vmem:[%s172] sm:$0xf]
        %v177 = vld [vmem:[%s172 + $0x4] sm:$0xf]
        %v178 = vld [vmem:[%s172 + $0x8] sm:$0xf]
        %v179 = vld [vmem:[%s172 + $0xc] sm:$0xf]
        %v180 = vld [vmem:[%s172 + $0x10] sm:$0xf]
        %v181 = vld [vmem:[%s172 + $0x14] sm:$0xf]
        %v182 = vld [vmem:[%s172 + $0x18] sm:$0xf]
        %v183 = vld [vmem:[%s172 + $0x1c] sm:$0xf]
        %v184 = vld [vmem:[%s1] sm:$0xf]
        %v185 = vld [vmem:[%s1 + $0x4] sm:$0xf]
        %v186 = vld [vmem:[%s1 + $0x8] sm:$0xf]
        %v187 = vld [vmem:[%s1 + $0xc] sm:$0xf]
        %v196 = vunpack.c.l.b16 %v176
        %v197 = vunpack.c.l.b16 %v177
        %v198 = vunpack.c.l.b16 %v178
        %v199 = vunpack.c.l.b16 %v179
        %v200 = vunpack.c.l.b16 %v180
        %v201 = vunpack.c.l.b16 %v181
        %v202 = vunpack.c.l.b16 %v182
        %v203 = vunpack.c.l.b16 %v183
        %v204 = vpack.c.b16 %v197, %v196
        %v205 = vpack.c.b16 %v199, %v198
        %v206 = vpack.c.b16 %v201, %v200
        %v207 = vpack.c.b16 %v203, %v202
        %v212 = vunpack.c.l.b16 %v184
        %v213 = vunpack.c.l.b16 %v185
        %v214 = vunpack.c.l.b16 %v186
        %v215 = vunpack.c.l.b16 %v187
        %v216 = vpack.c.b16 %v213, %v212
        %v217 = vpack.c.b16 %v215, %v214
        %vm220 = vcmask 261120
        %v222 = vsel %vm220, %v204, 0
        %v225 = vsel %vm220, %v205, 0
        %v228 = vsel %vm220, %v206, 0
        %v231 = vsel %vm220, %v207, 0
        %233 = vmatpush.bf16.msra.mxu0 0
        %234 = vmatpush.bf16.msra.mxu0 0
        %235 = vmatpush.bf16.msra.mxu0 0
        %236 = vmatpush.bf16.msra.mxu0 0
        %237 = vmatpush.bf16.msra.mxu0 0
        %238 = vmatpush.bf16.msra.mxu0 0
        %239 = vmatpush.bf16.msra.mxu0 %v217
        %240 = vmatpush.bf16.msra.mxu0 %v216
        %241 = vmatmul.bf16.gmra.mxu0 %v222
        %v242 = vpop.f32.mrf.mxu0
        %v243 = vadd.f32 0.0, %v242
        %v244 = vpop.f32.mrf.mxu0
        %v245 = vadd.f32 0.0, %v244
        %246 = vmatmul.bf16.gmra.mxu0 %v225
        %v247 = vpop.f32.mrf.mxu0
        %v248 = vadd.f32 0.0, %v247
        %v249 = vpop.f32.mrf.mxu0
        %v250 = vadd.f32 0.0, %v249
        %251 = vmatmul.bf16.gmra.mxu0 %v228
        %v252 = vpop.f32.mrf.mxu0
        %v253 = vadd.f32 0.0, %v252
        %v254 = vpop.f32.mrf.mxu0
        %v255 = vadd.f32 0.0, %v254
        %256 = vmatmul.bf16.gmra.mxu0 %v231
        %v257 = vpop.f32.mrf.mxu0
        %v258 = vadd.f32 0.0, %v257
        %v259 = vpop.f32.mrf.mxu0
        %v260 = vadd.f32 0.0, %v259
        %261 = vdwg.mxu0
        %v262 = vld [vmem:[%s2] sm:$0xf]
        %v263 = vld [vmem:[%s2 + $0x4] sm:$0xf]
        %v264 = vld [vmem:[%s2 + $0x8] sm:$0xf]
        %v265 = vld [vmem:[%s2 + $0xc] sm:$0xf]
        %v270 = vunpack.c.l.b16 %v262
        %v271 = vunpack.c.l.b16 %v263
        %v272 = vunpack.c.l.b16 %v264
        %v273 = vunpack.c.l.b16 %v265
        %v274 = vpack.c.b16 %v271, %v270
        %v275 = vpack.c.b16 %v273, %v272
        %278 = vmatpush.bf16.msra.mxu0 0
        %279 = vmatpush.bf16.msra.mxu0 0
        %280 = vmatpush.bf16.msra.mxu0 0
        %281 = vmatpush.bf16.msra.mxu0 0
        %282 = vmatpush.bf16.msra.mxu0 0
        %283 = vmatpush.bf16.msra.mxu0 0
        %284 = vmatpush.bf16.msra.mxu0 %v275
        %285 = vmatpush.bf16.msra.mxu0 %v274
        %286 = vmatmul.bf16.gmra.mxu0 %v222
        %v287 = vpop.f32.mrf.mxu0
        %v288 = vadd.f32 0.0, %v287
        %v289 = vpop.f32.mrf.mxu0
        %v290 = vadd.f32 0.0, %v289
        %291 = vmatmul.bf16.gmra.mxu0 %v225
        %v292 = vpop.f32.mrf.mxu0
        %v293 = vadd.f32 0.0, %v292
        %v294 = vpop.f32.mrf.mxu0
        %v295 = vadd.f32 0.0, %v294
        %296 = vmatmul.bf16.gmra.mxu0 %v228
        %v297 = vpop.f32.mrf.mxu0
        %v298 = vadd.f32 0.0, %v297
        %v299 = vpop.f32.mrf.mxu0
        %v300 = vadd.f32 0.0, %v299
        %301 = vmatmul.bf16.gmra.mxu0 %v231
        %v302 = vpop.f32.mrf.mxu0
        %v303 = vadd.f32 0.0, %v302
        %v304 = vpop.f32.mrf.mxu0
        %v305 = vadd.f32 0.0, %v304
        %306 = vdwg.mxu0
        %v307 = vpack.c.bf16 %v243, %v243
        %v308 = vpack.c.bf16 %v245, %v245
        %v309 = vpack.c.bf16 %v248, %v248
        %v310 = vpack.c.bf16 %v250, %v250
        %v311 = vpack.c.bf16 %v253, %v253
        %v312 = vpack.c.bf16 %v255, %v255
        %v313 = vpack.c.bf16 %v258, %v258
        %v314 = vpack.c.bf16 %v260, %v260
        %v315 = vpack.c.bf16 %v288, %v288
        %v316 = vpack.c.bf16 %v290, %v290
        %v317 = vpack.c.bf16 %v293, %v293
        %v318 = vpack.c.bf16 %v295, %v295
        %v319 = vpack.c.bf16 %v298, %v298
        %v320 = vpack.c.bf16 %v300, %v300
        %v321 = vpack.c.bf16 %v303, %v303
        %v322 = vpack.c.bf16 %v305, %v305
        %v325 = vunpack.c.l.b16 %v307
        %v326 = vunpack.c.l.b16 %v308
        %v327 = vpack.c.b16 %v326, %v325
        %v330 = vunpack.c.l.b16 %v315
        %v331 = vunpack.c.l.b16 %v316
        %v332 = vpack.c.b16 %v331, %v330
        %v334 = vsel %vm220, %v327, 0
        %v337 = vsel %vm220, %v332, 0
        %339 = vmatpush.bf16.xpose.msra.mxu0 0
        %340 = vmatpush.bf16.xpose.msra.mxu0 0
        %341 = vmatpush.bf16.xpose.msra.mxu0 0
        %342 = vmatpush.bf16.xpose.msra.mxu0 0
        %343 = vmatpush.bf16.xpose.msra.mxu0 0
        %344 = vmatpush.bf16.xpose.msra.mxu0 0
        %345 = vmatpush.bf16.xpose.msra.mxu0 0
        %346 = vmatpush.bf16.xpose.msra.mxu0 %v337
        %347 = vmatmul.bf16.gmra.mxu0 %v334
        %v348 = vpop.f32.mrf.mxu0
        %v349 = vadd.f32 0.0, %v348
        %v350 = vpop.f32.mrf.mxu0
        %v351 = vadd.f32 0.0, %v350
        %352 = vdwg.mxu0
        %v355 = vunpack.c.l.b16 %v309
        %v356 = vunpack.c.l.b16 %v310
        %v357 = vpack.c.b16 %v356, %v355
        %v360 = vunpack.c.l.b16 %v317
        %v361 = vunpack.c.l.b16 %v318
        %v362 = vpack.c.b16 %v361, %v360
        %v364 = vsel %vm220, %v357, 0
        %v367 = vsel %vm220, %v362, 0
        %369 = vmatpush.bf16.xpose.msra.mxu0 0
        %370 = vmatpush.bf16.xpose.msra.mxu0 0
        %371 = vmatpush.bf16.xpose.msra.mxu0 0
        %372 = vmatpush.bf16.xpose.msra.mxu0 0
        %373 = vmatpush.bf16.xpose.msra.mxu0 0
        %374 = vmatpush.bf16.xpose.msra.mxu0 0
        %375 = vmatpush.bf16.xpose.msra.mxu0 0
        %376 = vmatpush.bf16.xpose.msra.mxu0 %v367
        %377 = vmatmul.bf16.gmra.mxu0 %v364
        %v378 = vpop.f32.mrf.mxu0
        %v379 = vadd.f32 0.0, %v378
        %v380 = vpop.f32.mrf.mxu0
        %v381 = vadd.f32 0.0, %v380
        %382 = vdwg.mxu0
        %v385 = vunpack.c.l.b16 %v311
        %v386 = vunpack.c.l.b16 %v312
        %v387 = vpack.c.b16 %v386, %v385
        %v390 = vunpack.c.l.b16 %v319
        %v391 = vunpack.c.l.b16 %v320
        %v392 = vpack.c.b16 %v391, %v390
        %v394 = vsel %vm220, %v387, 0
        %v397 = vsel %vm220, %v392, 0
        %399 = vmatpush.bf16.xpose.msra.mxu0 0
        %400 = vmatpush.bf16.xpose.msra.mxu0 0
        %401 = vmatpush.bf16.xpose.msra.mxu0 0
        %402 = vmatpush.bf16.xpose.msra.mxu0 0
        %403 = vmatpush.bf16.xpose.msra.mxu0 0
        %404 = vmatpush.bf16.xpose.msra.mxu0 0
        %405 = vmatpush.bf16.xpose.msra.mxu0 0
        %406 = vmatpush.bf16.xpose.msra.mxu0 %v397
        %407 = vmatmul.bf16.gmra.mxu0 %v394
        %v408 = vpop.f32.mrf.mxu0
        %v409 = vadd.f32 0.0, %v408
        %v410 = vpop.f32.mrf.mxu0
        %v411 = vadd.f32 0.0, %v410
        %412 = vdwg.mxu0
        %v415 = vunpack.c.l.b16 %v313
        %v416 = vunpack.c.l.b16 %v314
        %v417 = vpack.c.b16 %v416, %v415
        %v420 = vunpack.c.l.b16 %v321
        %v421 = vunpack.c.l.b16 %v322
        %v422 = vpack.c.b16 %v421, %v420
        %v424 = vsel %vm220, %v417, 0
        %v427 = vsel %vm220, %v422, 0
        %429 = vmatpush.bf16.xpose.msra.mxu0 0
        %430 = vmatpush.bf16.xpose.msra.mxu0 0
        %431 = vmatpush.bf16.xpose.msra.mxu0 0
        %432 = vmatpush.bf16.xpose.msra.mxu0 0
        %433 = vmatpush.bf16.xpose.msra.mxu0 0
        %434 = vmatpush.bf16.xpose.msra.mxu0 0
        %435 = vmatpush.bf16.xpose.msra.mxu0 0
        %436 = vmatpush.bf16.xpose.msra.mxu0 %v427
        %437 = vmatmul.bf16.gmra.mxu0 %v424
        %v438 = vpop.f32.mrf.mxu0
        %v439 = vadd.f32 0.0, %v438
        %v440 = vpop.f32.mrf.mxu0
        %v441 = vadd.f32 0.0, %v440
        %442 = vdwg.mxu0
        %vm443 = vcmask 130048
        %v444 = vsel %vm443, %v349, -inf
        %445 = vmax.xlane.f32.xlu0 %v444
        %v446 = vpop.xlane.xlu0 %445
        %v447 = vsel %vm443, %v351, -inf
        %448 = vmax.xlane.f32.xlu0 %v447
        %v449 = vpop.xlane.xlu0 %448
        %v450 = vsel %vm443, %v379, -inf
        %451 = vmax.xlane.f32.xlu0 %v450
        %v452 = vpop.xlane.xlu0 %451
        %v453 = vsel %vm443, %v381, -inf
        %454 = vmax.xlane.f32.xlu0 %v453
        %v455 = vpop.xlane.xlu0 %454
        %v456 = vsel %vm443, %v409, -inf
        %457 = vmax.xlane.f32.xlu0 %v456
        %v458 = vpop.xlane.xlu0 %457
        %v459 = vsel %vm443, %v411, -inf
        %460 = vmax.xlane.f32.xlu0 %v459
        %v461 = vpop.xlane.xlu0 %460
        %v462 = vsel %vm443, %v439, -inf
        %463 = vmax.xlane.f32.xlu0 %v462
        %v464 = vpop.xlane.xlu0 %463
        %v465 = vsel %vm443, %v441, -inf
        %466 = vmax.xlane.f32.xlu0 %v465
        %v467 = vpop.xlane.xlu0 %466
        %v468 = vsub.f32 %v349, %v446
        %v469 = vsub.f32 %v351, %v449
        %v470 = vsub.f32 %v379, %v452
        %v471 = vsub.f32 %v381, %v455
        %v472 = vsub.f32 %v409, %v458
        %v473 = vsub.f32 %v411, %v461
        %v474 = vsub.f32 %v439, %v464
        %v475 = vsub.f32 %v441, %v467
        %v476 = vpack.c.bf16 %v468, %v468
        %v477 = vpack.c.bf16 %v469, %v469
        %v478 = vpack.c.bf16 %v470, %v470
        %v479 = vpack.c.bf16 %v471, %v471
        %v480 = vpack.c.bf16 %v472, %v472
        %v481 = vpack.c.bf16 %v473, %v473
        %v482 = vpack.c.bf16 %v474, %v474
        %v483 = vpack.c.bf16 %v475, %v475
        %v484 = vunpack.c.l.bf16 %v476
        %v485 = vunpack.c.l.bf16 %v477
        %v486 = vunpack.c.l.bf16 %v478
        %v487 = vunpack.c.l.bf16 %v479
        %v488 = vunpack.c.l.bf16 %v480
        %v489 = vunpack.c.l.bf16 %v481
        %v490 = vunpack.c.l.bf16 %v482
        %v491 = vunpack.c.l.bf16 %v483
        %v492 = vmul.f32 %v484, 1.442695
        %v493 = vpow.pop %v492
        %v494 = vmul.f32 %v485, 1.442695
        %v495 = vpow.pop %v494
        %v496 = vmul.f32 %v486, 1.442695
        %v497 = vpow.pop %v496
        %v498 = vmul.f32 %v487, 1.442695
        %v499 = vpow.pop %v498
        %v500 = vmul.f32 %v488, 1.442695
        %v501 = vpow.pop %v500
        %v502 = vmul.f32 %v489, 1.442695
        %v503 = vpow.pop %v502
        %v504 = vmul.f32 %v490, 1.442695
        %v505 = vpow.pop %v504
        %v506 = vmul.f32 %v491, 1.442695
        %v507 = vpow.pop %v506
        %v508 = vpack.c.bf16 %v493, %v493
        %v509 = vpack.c.bf16 %v495, %v495
        %v510 = vpack.c.bf16 %v497, %v497
        %v511 = vpack.c.bf16 %v499, %v499
        %v512 = vpack.c.bf16 %v501, %v501
        %v513 = vpack.c.bf16 %v503, %v503
        %v514 = vpack.c.bf16 %v505, %v505
        %v515 = vpack.c.bf16 %v507, %v507
        %v516 = vunpack.c.l.bf16 %v508
        %v517 = vunpack.c.l.bf16 %v509
        %v518 = vunpack.c.l.bf16 %v510
        %v519 = vunpack.c.l.bf16 %v511
        %v520 = vunpack.c.l.bf16 %v512
        %v521 = vunpack.c.l.bf16 %v513
        %v522 = vunpack.c.l.bf16 %v514
        %v523 = vunpack.c.l.bf16 %v515
        %v524 = vsel %vm443, %v516, 0.0
        %525 = vadd.xlane.f32.xlu0 %v524
        %v526 = vpop.xlane.xlu0 %525
        %v527 = vsel %vm443, %v517, 0.0
        %528 = vadd.xlane.f32.xlu0 %v527
        %v529 = vpop.xlane.xlu0 %528
        %v530 = vsel %vm443, %v518, 0.0
        %531 = vadd.xlane.f32.xlu0 %v530
        %v532 = vpop.xlane.xlu0 %531
        %v533 = vsel %vm443, %v519, 0.0
        %534 = vadd.xlane.f32.xlu0 %v533
        %v535 = vpop.xlane.xlu0 %534
        %v536 = vsel %vm443, %v520, 0.0
        %537 = vadd.xlane.f32.xlu0 %v536
        %v538 = vpop.xlane.xlu0 %537
        %v539 = vsel %vm443, %v521, 0.0
        %540 = vadd.xlane.f32.xlu0 %v539
        %v541 = vpop.xlane.xlu0 %540
        %v542 = vsel %vm443, %v522, 0.0
        %543 = vadd.xlane.f32.xlu0 %v542
        %v544 = vpop.xlane.xlu0 %543
        %v545 = vsel %vm443, %v523, 0.0
        %546 = vadd.xlane.f32.xlu0 %v545
        %v547 = vpop.xlane.xlu0 %546
        %v548 = vrcp.pop %v526
        %v549 = vmul.f32 %v526, %v548
        %v550 = vsub.f32 1.0, %v549
        %v551 = vmul.f32 %v548, %v550
        %v552 = vadd.f32 %v548, %v551
        %vm553 = vweird.f32 %v526
        %vm554 = vweird.f32 %v548
        %vm555 = vmor %vm553, %vm554
        %v556 = vsel %vm555, %v548, %v552
        %v557 = vand.u32 2147483647, %v526
        %vm558 = vcmp.eq.f32.partialorder %v557, 8.507059e+37
        %v559 = vand.u32 %v526, 2147483648
        %v560 = vor.u32 1.1754944e-38, %v559
        %v561 = vsel %vm558, %v560, %v556
        %v562 = vrcp.pop %v529
        %v563 = vmul.f32 %v529, %v562
        %v564 = vsub.f32 1.0, %v563
        %v565 = vmul.f32 %v562, %v564
        %v566 = vadd.f32 %v562, %v565
        %vm567 = vweird.f32 %v529
        %vm568 = vweird.f32 %v562
        %vm569 = vmor %vm567, %vm568
        %v570 = vsel %vm569, %v562, %v566
        %v571 = vand.u32 2147483647, %v529
        %vm572 = vcmp.eq.f32.partialorder %v571, 8.507059e+37
        %v573 = vand.u32 %v529, 2147483648
        %v574 = vor.u32 1.1754944e-38, %v573
        %v575 = vsel %vm572, %v574, %v570
        %v576 = vrcp.pop %v532
        %v577 = vmul.f32 %v532, %v576
        %v578 = vsub.f32 1.0, %v577
        %v579 = vmul.f32 %v576, %v578
        %v580 = vadd.f32 %v576, %v579
        %vm581 = vweird.f32 %v532
        %vm582 = vweird.f32 %v576
        %vm583 = vmor %vm581, %vm582
        %v584 = vsel %vm583, %v576, %v580
        %v585 = vand.u32 2147483647, %v532
        %vm586 = vcmp.eq.f32.partialorder %v585, 8.507059e+37
        %v587 = vand.u32 %v532, 2147483648
        %v588 = vor.u32 1.1754944e-38, %v587
        %v589 = vsel %vm586, %v588, %v584
        %v590 = vrcp.pop %v535
        %v591 = vmul.f32 %v535, %v590
        %v592 = vsub.f32 1.0, %v591
        %v593 = vmul.f32 %v590, %v592
        %v594 = vadd.f32 %v590, %v593
        %vm595 = vweird.f32 %v535
        %vm596 = vweird.f32 %v590
        %vm597 = vmor %vm595, %vm596
        %v598 = vsel %vm597, %v590, %v594
        %v599 = vand.u32 2147483647, %v535
        %vm600 = vcmp.eq.f32.partialorder %v599, 8.507059e+37
        %v601 = vand.u32 %v535, 2147483648
        %v602 = vor.u32 1.1754944e-38, %v601
        %v603 = vsel %vm600, %v602, %v598
        %v604 = vrcp.pop %v538
        %v605 = vmul.f32 %v538, %v604
        %v606 = vsub.f32 1.0, %v605
        %v607 = vmul.f32 %v604, %v606
        %v608 = vadd.f32 %v604, %v607
        %vm609 = vweird.f32 %v538
        %vm610 = vweird.f32 %v604
        %vm611 = vmor %vm609, %vm610
        %v612 = vsel %vm611, %v604, %v608
        %v613 = vand.u32 2147483647, %v538
        %vm614 = vcmp.eq.f32.partialorder %v613, 8.507059e+37
        %v615 = vand.u32 %v538, 2147483648
        %v616 = vor.u32 1.1754944e-38, %v615
        %v617 = vsel %vm614, %v616, %v612
        %v618 = vrcp.pop %v541
        %v619 = vmul.f32 %v541, %v618
        %v620 = vsub.f32 1.0, %v619
        %v621 = vmul.f32 %v618, %v620
        %v622 = vadd.f32 %v618, %v621
        %vm623 = vweird.f32 %v541
        %vm624 = vweird.f32 %v618
        %vm625 = vmor %vm623, %vm624
        %v626 = vsel %vm625, %v618, %v622
        %v627 = vand.u32 2147483647, %v541
        %vm628 = vcmp.eq.f32.partialorder %v627, 8.507059e+37
        %v629 = vand.u32 %v541, 2147483648
        %v630 = vor.u32 1.1754944e-38, %v629
        %v631 = vsel %vm628, %v630, %v626
        %v632 = vrcp.pop %v544
        %v633 = vmul.f32 %v544, %v632
        %v634 = vsub.f32 1.0, %v633
        %v635 = vmul.f32 %v632, %v634
        %v636 = vadd.f32 %v632, %v635
        %vm637 = vweird.f32 %v544
        %vm638 = vweird.f32 %v632
        %vm639 = vmor %vm637, %vm638
        %v640 = vsel %vm639, %v632, %v636
        %v641 = vand.u32 2147483647, %v544
        %vm642 = vcmp.eq.f32.partialorder %v641, 8.507059e+37
        %v643 = vand.u32 %v544, 2147483648
        %v644 = vor.u32 1.1754944e-38, %v643
        %v645 = vsel %vm642, %v644, %v640
        %v646 = vrcp.pop %v547
        %v647 = vmul.f32 %v547, %v646
        %v648 = vsub.f32 1.0, %v647
        %v649 = vmul.f32 %v646, %v648
        %v650 = vadd.f32 %v646, %v649
        %vm651 = vweird.f32 %v547
        %vm652 = vweird.f32 %v646
        %vm653 = vmor %vm651, %vm652
        %v654 = vsel %vm653, %v646, %v650
        %v655 = vand.u32 2147483647, %v547
        %vm656 = vcmp.eq.f32.partialorder %v655, 8.507059e+37
        %v657 = vand.u32 %v547, 2147483648
        %v658 = vor.u32 1.1754944e-38, %v657
        %v659 = vsel %vm656, %v658, %v654
        %v660 = vmul.f32 %v516, %v561
        %v661 = vmul.f32 %v517, %v575
        %v662 = vmul.f32 %v518, %v589
        %v663 = vmul.f32 %v519, %v603
        %v664 = vmul.f32 %v520, %v617
        %v665 = vmul.f32 %v521, %v631
        %v666 = vmul.f32 %v522, %v645
        %v667 = vmul.f32 %v523, %v659
        %v668 = vpack.c.bf16 %v660, %v660
        %v669 = vpack.c.bf16 %v661, %v661
        %v670 = vpack.c.bf16 %v662, %v662
        %v671 = vpack.c.bf16 %v663, %v663
        %v672 = vpack.c.bf16 %v664, %v664
        %v673 = vpack.c.bf16 %v665, %v665
        %v674 = vpack.c.bf16 %v666, %v666
        %v675 = vpack.c.bf16 %v667, %v667
        %vm676 = vcmask 125952
        %677 = vst.msk [vmem:[%s166] sm:$0xf] %vm676, %v668
        %678 = vst.msk [vmem:[%s166 + $0x4] sm:$0xf] %vm676, %v669
        %679 = vst.msk [vmem:[%s166 + $0x8] sm:$0xf] %vm676, %v670
        %680 = vst.msk [vmem:[%s166 + $0xc] sm:$0xf] %vm676, %v671
        %681 = vst.msk [vmem:[%s166 + $0x10] sm:$0xf] %vm676, %v672
        %682 = vst.msk [vmem:[%s166 + $0x14] sm:$0xf] %vm676, %v673
        %683 = vst.msk [vmem:[%s166 + $0x18] sm:$0xf] %vm676, %v674
        %684 = vst.msk [vmem:[%s166 + $0x1c] sm:$0xf] %vm676, %v675
        %s685 = sand.u32 %s93, 1
        %s686 = scalar_lea.sflag [#allocation3], %s685
        %s687 = sand.u32 %s93, 1
        %s688 = smul.addr %s687, 32
        %s689 = scalar_lea.vmem [#allocation2], %s688
        // Predicated region
        $region33: #{compute_g_spa.1} parent=31 // pred_check
          %p690 = pneg %p103
        $region34: #{compute_g_spa.1} parent=31 // pred_check_branch
          %692 = sbr.rel (%p690) target = $region36
        $region35: #{compute_g_spa.1} parent=31 // pred_region
          %s693 = smul.u32 4, %s17
          %695 = vsyncadd %s686, 0
          %s696 = smul.addr %s693, 2
          %s697 = smul.addr %s696, 4
          %s698 = scalar_lea.hbm %s3, %s697
          %s699 = sshll.u32 %s689, 4
          %s700 = int_to_ptr.vmem [resolvable:$true] %s699
          %s701 = sshll.u32 %s698, 4
          %s702 = int_to_ptr.hbm [resolvable:$true] %s701
          %707 = dma.vmem_to_hbm [thread:$0]  %s700, 512, %s702, %s686, 64, 64, 4
        $region36: #{compute_g_spa.1} parent=31 // pred_fallthru
          _
      $region32: #{compute_g_spa.1} parent=5 // pred_fallthru
        _
      %p708 = scmp.le.s32.totalorder 2, %s12
      // Predicated region
      $region37: #{compute_g_spa.1} parent=5 // pred_check
        %p709 = pneg %p708
      $region38: #{compute_g_spa.1} parent=5 // pred_check_branch
        %711 = sbr.rel (%p709) target = $region40
      $region39: #{compute_g_spa.1} parent=5 // pred_region
        %s712 = ssub.s32 %s12, 2
        // Predicated region
        $region41: #{compute_g_spa.1} parent=39 // pred_check
          %p713 = pneg %p109
        $region42: #{compute_g_spa.1} parent=39 // pred_check_branch
          %715 = sbr.rel (%p713) target = $region44
        $region43: #{compute_g_spa.1} parent=39 // pred_region
          %s716 = sand.u32 %s94, 1
          %s717 = scalar_lea.sflag [#allocation3], %s716
          %s718 = sand.u32 %s94, 1
          %s719 = smul.addr %s718, 32
          %s720 = scalar_lea.vmem [#allocation2], %s719
          %722 = dma.done %s717, 512
        $region44: #{compute_g_spa.1} parent=39 // pred_fallthru
          _
      $region40: #{compute_g_spa.1} parent=5 // pred_fallthru
        _
    $region6: #{compute_g_spa.1} parent=1 // loop_footer
      %s16 = sadd.s32 1, %s12
    $region7: #{compute_g_spa.1} parent=1 // loop_footer_branch
      %11 = sbr.rel target = $region3
    $region8: #{compute_g_spa.1} parent=1 // loop_exit
      _
    %723 = vsyncpa [#allocation3], 1
    %s724 = scalar_lea.sflag [#allocation3], 1
    %725 = vsyncpa %s724, 1

</llo_original>
